<compile_context>
chip_gen: v7x
topology: tpu7x:2x2x1
jax: 0.10.0
libtpu: 0.0.40
codegen_flags: <defaults>
</compile_context>

<pallas_src>
import functools

import jax
import jax.numpy as jnp
from jax.experimental import pallas as pl
from jax.experimental.pallas import tpu as pltpu

HALO = 128  # lane-aligned left-halo width; must be >= max dilation (32 by default)


def _comb_kernel(x_ref, xh_ref, w_ref, o_ref, xpad_ref, *, shifts, tT, C, Nb):
    # x_ref   : (Nb, C, tT)        VMEM, current time tile of the input
    # xh_ref  : (Nb, C, HALO)      VMEM, last HALO samples of the previous time tile
    #                              (contents ignored on the first time tile)
    # w_ref   : (nS, C)            SMEM, fused comb+linear weights (row 0 <-> shift 0)
    # o_ref   : (Nb, tT)           VMEM, output tile (lane-dense)
    # xpad_ref: (C, Nb, HALO + tT) VMEM scratch, channel-major: [halo | current tile]
    t = pl.program_id(1)

    # Stage the current tile at the lane-aligned offset HALO.
    # One (Nb, tT) relayout per channel -- the only cross-layout copies in the kernel.
    for c in range(C):
        xpad_ref[c, :, HALO:] = x_ref[:, c, :].astype(xpad_ref.dtype)

    # Left halo: zeros on the first time tile (== F.pad(x, [L, 0])), otherwise the
    # tail of the previous tile (re-read from HBM, so time tiles stay independent).
    @pl.when(t == 0)
    def _():
        xpad_ref[:, :, :HALO] = jnp.zeros((C, Nb, HALO), xpad_ref.dtype)

    @pl.when(t > 0)
    def _():
        for c in range(C):
            xpad_ref[c, :, :HALO] = xh_ref[:, c, :].astype(xpad_ref.dtype)

    # Fused comb filters + Linear: nS * C scalar * (Nb, tT) MACs on the VPU.
    # Independent partial sums -> parallel dependence chains for the VLIW packer.
    n_acc = 4
    accs = [jnp.zeros((Nb, tT), jnp.float32) for _ in range(n_acc)]
    idx = 0
    for j, L in enumerate(shifts):
        off = HALO - L                                   # static lane offset
        for c in range(C):
            xs = xpad_ref[c, :, pl.ds(off, tT)]          # (Nb, tT) lane-shifted window
            accs[idx % n_acc] = accs[idx % n_acc] + w_ref[j, c] * xs
            idx += 1
    acc = (accs[0] + accs[1]) + (accs[2] + accs[3])
    o_ref[...] = acc.astype(o_ref.dtype)


def _pick_time_tile(Tp, cap=8192):
    """Largest multiple-of-128 tile <= cap dividing Tp (Tp is a multiple of 128)."""
    if Tp <= cap:
        return Tp
    for cand in range(cap - cap % 128, 127, -128):
        if Tp % cand == 0:
            return cand
    return 128  # always divides since Tp % 128 == 0


def post_processing_comb_net(x, wconv, wlin, Ls):
    """x: (N, C, T); wconv: (nL, fm_per, C, 2); wlin: (1, nL*fm_per). Returns (N, 1, T)."""
    N, C, T = x.shape
    nL, fm_per, C2, K2 = wconv.shape
    assert C2 == C and K2 == 2 and len(Ls) == nL
    Lmax = max(int(l) for l in Ls)
    assert Lmax <= HALO, "dilations larger than 128 need a wider halo"

    # ---- Fold Linear(fmaps -> 1) into the comb weights (algebraic fusion). ----
    wlin_r = wlin.reshape(nL, fm_per).astype(jnp.float32)
    w0 = wconv[..., 0].astype(jnp.float32)                        # (nL, fm_per, C) delayed tap
    w1 = wconv[..., 1].astype(jnp.float32)                        # (nL, fm_per, C) current tap
    v_delay = jnp.einsum('if,ifc->ic', wlin_r, w0)                # (nL, C)
    v_cur = jnp.einsum('if,ifc->c', wlin_r, w1)                   # (C,) summed over filters
    w_fused = jnp.concatenate([v_cur[None, :], v_delay], axis=0)  # (nL+1, C); row 0 = shift 0
    shifts = (0,) + tuple(int(l) for l in Ls)

    # ---- Pad batch to 8 sublanes and time to 128 lanes (sliced back below). ----
    Nb = 8
    Np = ((N + Nb - 1) // Nb) * Nb
    Tp = ((T + 127) // 128) * 128
    x_in = x
    if Np != N or Tp != T:
        # Right-pad time with zeros (comb is causal -> padded outputs don't leak back);
        # zero-pad extra batch rows (discarded on slice).
        x_in = jnp.pad(x, ((0, Np - N), (0, 0), (0, Tp - T)))

    tT = _pick_time_tile(Tp)
    assert Tp % tT == 0 and tT % 128 == 0
    grid = (Np // Nb, Tp // tT)
    blocks_per_tile = tT // HALO

    kernel = functools.partial(_comb_kernel, shifts=shifts, tT=tT, C=C, Nb=Nb)

    out2d = pl.pallas_call(
        kernel,
        out_shape=jax.ShapeDtypeStruct((Np, Tp), x.dtype),
        grid_spec=pltpu.PrefetchScalarGridSpec(
            num_scalar_prefetch=0,
            grid=grid,
            in_specs=[
                # Current time tile.
                pl.BlockSpec((Nb, C, tT), lambda n, t: (n, 0, t)),
                # Last HALO samples of the previous tile (clamped to block 0 at t==0,
                # where the kernel ignores it and uses zeros instead).
                pl.BlockSpec(
                    (Nb, C, HALO),
                    lambda n, t: (n, 0, jnp.maximum(t * blocks_per_tile - 1, 0)),
                ),
                # Tiny fused weight table: scalar reads from SMEM.
                pl.BlockSpec(memory_space=pltpu.MemorySpace.SMEM),
            ],
            out_specs=pl.BlockSpec((Nb, tT), lambda n, t: (n, t)),
            scratch_shapes=[pltpu.VMEM((C, Nb, HALO + tT), jnp.float32)],
        ),
        compiler_params=pltpu.CompilerParams(
            # Both axes independent: batch blocks AND time tiles can be split across
            # TensorCores (v7x megacore) since the halo is re-read from HBM.
            dimension_semantics=("parallel", "parallel"),
            vmem_limit_bytes=32 * 1024 * 1024,
        ),
    )(x_in, x_in, w_fused)

    return out2d[:N, None, :T]            # (N, 1, T) to match the PyTorch module


def _reference(x, wconv, wlin, Ls):
    """Pure-JAX reference reproducing the PyTorch forward."""
    N, C, T = x.shape
    hs = []
    for li, L in enumerate(Ls):
        xp = jnp.pad(x, ((0, 0), (0, 0), (L, 0)))        # F.pad(x, [L, 0])
        w0 = wconv[li, :, :, 0]
        w1 = wconv[li, :, :, 1]
        h = (jnp.einsum('fc,nct->nft', w0, xp[:, :, :T]) +
             jnp.einsum('fc,nct->nft', w1, xp[:, :, L:]))
        hs.append(h)
    hcat = jnp.concatenate(hs, axis=1)                    # (N, fmaps, T)
    return jnp.einsum('of,nft->not', wlin, hcat)          # (N, 1, T)


if __name__ == "__main__":
    # Small shapes consistent with the module's forward:
    N, C, T = 2, 4, 128          # batch, ninputs (channels), time
    Ls = (4, 8, 16, 32)          # default dilations
    fmaps = 8                    # total feature maps (fm_per = fmaps // len(Ls) = 2)
    fm_per = fmaps // len(Ls)

    key = jax.random.PRNGKey(0)
    kx, kw, kl = jax.random.split(key, 3)

    # Input signal.
    x = jax.random.normal(kx, (N, C, T), dtype=jnp.float32)

    # CombFilter weights: column 0 ~ U[0,1), column 1 == 1 (per the module __init__).
    w_rand = jax.random.uniform(kw, (len(Ls), fm_per, C), dtype=jnp.float32)
    wconv = jnp.stack([w_rand, jnp.ones_like(w_rand)], axis=-1)  # (nL, fm_per, C, 2)

    # Linear(fmaps, 1, bias=False): PyTorch default init U(-1/sqrt(fmaps), 1/sqrt(fmaps)).
    bound = 1.0 / (fmaps ** 0.5)
    wlin = jax.random.uniform(kl, (1, fmaps), minval=-bound, maxval=bound,
                              dtype=jnp.float32)

    out = post_processing_comb_net(x, wconv, wlin, Ls)
    out = jax.block_until_ready(out)

    ref = _reference(x, wconv, wlin, Ls)
    assert out.shape == (N, 1, T), out.shape
    assert jnp.allclose(out, ref, atol=1e-5, rtol=1e-5), float(jnp.abs(out - ref).max())

    print("KERNEL_OK")
</pallas_src>

<mosaic_0001>
module attributes {stable_mosaic.version = 11 : i64} {
  func.func @_comb_kernel(%arg0: i32, %arg1: i32, %arg2: memref<8x4x128xf32, #tpu.memory_space<vmem>>, %arg3: memref<8x4x128xf32, #tpu.memory_space<vmem>>, %arg4: memref<5x4xf32, #tpu.memory_space<smem>>, %arg5: memref<8x128xf32, #tpu.memory_space<vmem>>, %arg6: memref<4x8x256xf32, #tpu.memory_space<vmem>>) attributes {dimension_semantics = [#tpu.dimension_semantics<parallel>, #tpu.dimension_semantics<parallel>], iteration_bounds = array<i64: 1, 1>, scalar_prefetch = 0 : i64, scratch_operands = 1 : i64, tpu.core_type = #tpu.core_type<tc>, window_params = [{transform_indices = @transform_0, window_bounds = array<i64: 8, 4, 128>}, {transform_indices = @transform_1, window_bounds = array<i64: 8, 4, 128>}, {transform_indices = @transform_2, window_bounds = array<i64: 5, 4>}, {transform_indices = @transform_3, window_bounds = array<i64: 8, 128>}]} {
    %c0 = arith.constant 0 : index
    %c0_0 = arith.constant 0 : index
    %c0_1 = arith.constant 0 : index
    %0 = vector.load %arg2[%c0, %c0_0, %c0_1] : memref<8x4x128xf32, #tpu.memory_space<vmem>>, vector<8x1x128xf32>
    %1 = vector.shape_cast %0 : vector<8x1x128xf32> to vector<8x128xf32>
    %c0_2 = arith.constant 0 : index
    %c0_3 = arith.constant 0 : index
    %c128 = arith.constant 128 : index
    %2 = vector.load %arg6[%c0_2, %c0_3, %c128] : memref<4x8x256xf32, #tpu.memory_space<vmem>>, vector<1x8x128xf32>
    %3 = vector.shape_cast %2 : vector<1x8x128xf32> to vector<8x128xf32>
    %4 = vector.shape_cast %1 : vector<8x128xf32> to vector<1x8x128xf32>
    tpu.vector_store %arg6[%c0_2, %c0_3, %c128], %4 {strides = array<i32>} : memref<4x8x256xf32, #tpu.memory_space<vmem>>, vector<1x8x128xf32>,
    %c0_4 = arith.constant 0 : index
    %c1 = arith.constant 1 : index
    %c0_5 = arith.constant 0 : index
    %5 = vector.load %arg2[%c0_4, %c1, %c0_5] : memref<8x4x128xf32, #tpu.memory_space<vmem>>, vector<8x1x128xf32>
    %6 = vector.shape_cast %5 : vector<8x1x128xf32> to vector<8x128xf32>
    %c1_6 = arith.constant 1 : index
    %c0_7 = arith.constant 0 : index
    %c128_8 = arith.constant 128 : index
    %7 = vector.load %arg6[%c1_6, %c0_7, %c128_8] : memref<4x8x256xf32, #tpu.memory_space<vmem>>, vector<1x8x128xf32>
    %8 = vector.shape_cast %7 : vector<1x8x128xf32> to vector<8x128xf32>
    %9 = vector.shape_cast %6 : vector<8x128xf32> to vector<1x8x128xf32>
    tpu.vector_store %arg6[%c1_6, %c0_7, %c128_8], %9 {strides = array<i32>} : memref<4x8x256xf32, #tpu.memory_space<vmem>>, vector<1x8x128xf32>,
    %c0_9 = arith.constant 0 : index
    %c2 = arith.constant 2 : index
    %c0_10 = arith.constant 0 : index
    %10 = vector.load %arg2[%c0_9, %c2, %c0_10] : memref<8x4x128xf32, #tpu.memory_space<vmem>>, vector<8x1x128xf32>
    %11 = vector.shape_cast %10 : vector<8x1x128xf32> to vector<8x128xf32>
    %c2_11 = arith.constant 2 : index
    %c0_12 = arith.constant 0 : index
    %c128_13 = arith.constant 128 : index
    %12 = vector.load %arg6[%c2_11, %c0_12, %c128_13] : memref<4x8x256xf32, #tpu.memory_space<vmem>>, vector<1x8x128xf32>
    %13 = vector.shape_cast %12 : vector<1x8x128xf32> to vector<8x128xf32>
    %14 = vector.shape_cast %11 : vector<8x128xf32> to vector<1x8x128xf32>
    tpu.vector_store %arg6[%c2_11, %c0_12, %c128_13], %14 {strides = array<i32>} : memref<4x8x256xf32, #tpu.memory_space<vmem>>, vector<1x8x128xf32>,
    %c0_14 = arith.constant 0 : index
    %c3 = arith.constant 3 : index
    %c0_15 = arith.constant 0 : index
    %15 = vector.load %arg2[%c0_14, %c3, %c0_15] : memref<8x4x128xf32, #tpu.memory_space<vmem>>, vector<8x1x128xf32>
    %16 = vector.shape_cast %15 : vector<8x1x128xf32> to vector<8x128xf32>
    %c3_16 = arith.constant 3 : index
    %c0_17 = arith.constant 0 : index
    %c128_18 = arith.constant 128 : index
    %17 = vector.load %arg6[%c3_16, %c0_17, %c128_18] : memref<4x8x256xf32, #tpu.memory_space<vmem>>, vector<1x8x128xf32>
    %18 = vector.shape_cast %17 : vector<1x8x128xf32> to vector<8x128xf32>
    %19 = vector.shape_cast %16 : vector<8x128xf32> to vector<1x8x128xf32>
    tpu.vector_store %arg6[%c3_16, %c0_17, %c128_18], %19 {strides = array<i32>} : memref<4x8x256xf32, #tpu.memory_space<vmem>>, vector<1x8x128xf32>,
    %c0_i32 = arith.constant 0 : i32
    %20 = arith.cmpi eq, %arg1, %c0_i32 : i32
    %21 = arith.extui %20 : i1 to i32
    %c0_i32_19 = arith.constant 0 : i32
    %22 = arith.cmpi ne, %21, %c0_i32_19 : i32
    scf.if %22 {
      %cst_122 = arith.constant 0.000000e+00 : f32
      %154 = vector.broadcast %cst_122 : f32 to vector<4x8x128xf32>
      %c0_123 = arith.constant 0 : index
      %c0_124 = arith.constant 0 : index
      %c0_125 = arith.constant 0 : index
      %155 = vector.load %arg6[%c0_123, %c0_124, %c0_125] : memref<4x8x256xf32, #tpu.memory_space<vmem>>, vector<4x8x128xf32>
      tpu.vector_store %arg6[%c0_123, %c0_124, %c0_125], %154 {strides = array<i32>} : memref<4x8x256xf32, #tpu.memory_space<vmem>>, vector<4x8x128xf32>,
    } else {
    }
    %c0_i32_20 = arith.constant 0 : i32
    %23 = arith.cmpi sgt, %arg1, %c0_i32_20 : i32
    %24 = arith.extui %23 : i1 to i32
    %c0_i32_21 = arith.constant 0 : i32
    %25 = arith.cmpi ne, %24, %c0_i32_21 : i32
    scf.if %25 {
      %c0_122 = arith.constant 0 : index
      %c0_123 = arith.constant 0 : index
      %c0_124 = arith.constant 0 : index
      %154 = vector.load %arg3[%c0_122, %c0_123, %c0_124] : memref<8x4x128xf32, #tpu.memory_space<vmem>>, vector<8x1x128xf32>
      %155 = vector.shape_cast %154 : vector<8x1x128xf32> to vector<8x128xf32>
      %c0_125 = arith.constant 0 : index
      %c0_126 = arith.constant 0 : index
      %c0_127 = arith.constant 0 : index
      %156 = vector.load %arg6[%c0_125, %c0_126, %c0_127] : memref<4x8x256xf32, #tpu.memory_space<vmem>>, vector<1x8x128xf32>
      %157 = vector.shape_cast %156 : vector<1x8x128xf32> to vector<8x128xf32>
      %158 = vector.shape_cast %155 : vector<8x128xf32> to vector<1x8x128xf32>
      tpu.vector_store %arg6[%c0_125, %c0_126, %c0_127], %158 {strides = array<i32>} : memref<4x8x256xf32, #tpu.memory_space<vmem>>, vector<1x8x128xf32>,
      %c0_128 = arith.constant 0 : index
      %c1_129 = arith.constant 1 : index
      %c0_130 = arith.constant 0 : index
      %159 = vector.load %arg3[%c0_128, %c1_129, %c0_130] : memref<8x4x128xf32, #tpu.memory_space<vmem>>, vector<8x1x128xf32>
      %160 = vector.shape_cast %159 : vector<8x1x128xf32> to vector<8x128xf32>
      %c1_131 = arith.constant 1 : index
      %c0_132 = arith.constant 0 : index
      %c0_133 = arith.constant 0 : index
      %161 = vector.load %arg6[%c1_131, %c0_132, %c0_133] : memref<4x8x256xf32, #tpu.memory_space<vmem>>, vector<1x8x128xf32>
      %162 = vector.shape_cast %161 : vector<1x8x128xf32> to vector<8x128xf32>
      %163 = vector.shape_cast %160 : vector<8x128xf32> to vector<1x8x128xf32>
      tpu.vector_store %arg6[%c1_131, %c0_132, %c0_133], %163 {strides = array<i32>} : memref<4x8x256xf32, #tpu.memory_space<vmem>>, vector<1x8x128xf32>,
      %c0_134 = arith.constant 0 : index
      %c2_135 = arith.constant 2 : index
      %c0_136 = arith.constant 0 : index
      %164 = vector.load %arg3[%c0_134, %c2_135, %c0_136] : memref<8x4x128xf32, #tpu.memory_space<vmem>>, vector<8x1x128xf32>
      %165 = vector.shape_cast %164 : vector<8x1x128xf32> to vector<8x128xf32>
      %c2_137 = arith.constant 2 : index
      %c0_138 = arith.constant 0 : index
      %c0_139 = arith.constant 0 : index
      %166 = vector.load %arg6[%c2_137, %c0_138, %c0_139] : memref<4x8x256xf32, #tpu.memory_space<vmem>>, vector<1x8x128xf32>
      %167 = vector.shape_cast %166 : vector<1x8x128xf32> to vector<8x128xf32>
      %168 = vector.shape_cast %165 : vector<8x128xf32> to vector<1x8x128xf32>
      tpu.vector_store %arg6[%c2_137, %c0_138, %c0_139], %168 {strides = array<i32>} : memref<4x8x256xf32, #tpu.memory_space<vmem>>, vector<1x8x128xf32>,
      %c0_140 = arith.constant 0 : index
      %c3_141 = arith.constant 3 : index
      %c0_142 = arith.constant 0 : index
      %169 = vector.load %arg3[%c0_140, %c3_141, %c0_142] : memref<8x4x128xf32, #tpu.memory_space<vmem>>, vector<8x1x128xf32>
      %170 = vector.shape_cast %169 : vector<8x1x128xf32> to vector<8x128xf32>
      %c3_143 = arith.constant 3 : index
      %c0_144 = arith.constant 0 : index
      %c0_145 = arith.constant 0 : index
      %171 = vector.load %arg6[%c3_143, %c0_144, %c0_145] : memref<4x8x256xf32, #tpu.memory_space<vmem>>, vector<1x8x128xf32>
      %172 = vector.shape_cast %171 : vector<1x8x128xf32> to vector<8x128xf32>
      %173 = vector.shape_cast %170 : vector<8x128xf32> to vector<1x8x128xf32>
      tpu.vector_store %arg6[%c3_143, %c0_144, %c0_145], %173 {strides = array<i32>} : memref<4x8x256xf32, #tpu.memory_space<vmem>>, vector<1x8x128xf32>,
    } else {
    }
    %cst = arith.constant 0.000000e+00 : f32
    %26 = vector.broadcast %cst : f32 to vector<8x128xf32>
    %cst_22 = arith.constant 0.000000e+00 : f32
    %27 = vector.broadcast %cst_22 : f32 to vector<8x128xf32>
    %cst_23 = arith.constant 0.000000e+00 : f32
    %28 = vector.broadcast %cst_23 : f32 to vector<8x128xf32>
    %cst_24 = arith.constant 0.000000e+00 : f32
    %29 = vector.broadcast %cst_24 : f32 to vector<8x128xf32>
    %c0_25 = arith.constant 0 : index
    %c0_26 = arith.constant 0 : index
    %c128_27 = arith.constant 128 : index
    %30 = vector.load %arg6[%c0_25, %c0_26, %c128_27] : memref<4x8x256xf32, #tpu.memory_space<vmem>>, vector<1x8x128xf32>
    %31 = vector.shape_cast %30 : vector<1x8x128xf32> to vector<8x128xf32>
    %c0_28 = arith.constant 0 : index
    %c0_29 = arith.constant 0 : index
    %32 = memref.load %arg4[%c0_28, %c0_29] : memref<5x4xf32, #tpu.memory_space<smem>>
    %33 = vector.broadcast %32 : f32 to vector<8x128xf32>
    %34 = arith.mulf %33, %31 : vector<8x128xf32>
    %35 = arith.addf %26, %34 : vector<8x128xf32>
    %c1_30 = arith.constant 1 : index
    %c0_31 = arith.constant 0 : index
    %c128_32 = arith.constant 128 : index
    %36 = vector.load %arg6[%c1_30, %c0_31, %c128_32] : memref<4x8x256xf32, #tpu.memory_space<vmem>>, vector<1x8x128xf32>
    %37 = vector.shape_cast %36 : vector<1x8x128xf32> to vector<8x128xf32>
    %c0_33 = arith.constant 0 : index
    %c1_34 = arith.constant 1 : index
    %38 = memref.load %arg4[%c0_33, %c1_34] : memref<5x4xf32, #tpu.memory_space<smem>>
    %39 = vector.broadcast %38 : f32 to vector<8x128xf32>
    %40 = arith.mulf %39, %37 : vector<8x128xf32>
    %41 = arith.addf %27, %40 : vector<8x128xf32>
    %c2_35 = arith.constant 2 : index
    %c0_36 = arith.constant 0 : index
    %c128_37 = arith.constant 128 : index
    %42 = vector.load %arg6[%c2_35, %c0_36, %c128_37] : memref<4x8x256xf32, #tpu.memory_space<vmem>>, vector<1x8x128xf32>
    %43 = vector.shape_cast %42 : vector<1x8x128xf32> to vector<8x128xf32>
    %c0_38 = arith.constant 0 : index
    %c2_39 = arith.constant 2 : index
    %44 = memref.load %arg4[%c0_38, %c2_39] : memref<5x4xf32, #tpu.memory_space<smem>>
    %45 = vector.broadcast %44 : f32 to vector<8x128xf32>
    %46 = arith.mulf %45, %43 : vector<8x128xf32>
    %47 = arith.addf %28, %46 : vector<8x128xf32>
    %c3_40 = arith.constant 3 : index
    %c0_41 = arith.constant 0 : index
    %c128_42 = arith.constant 128 : index
    %48 = vector.load %arg6[%c3_40, %c0_41, %c128_42] : memref<4x8x256xf32, #tpu.memory_space<vmem>>, vector<1x8x128xf32>
    %49 = vector.shape_cast %48 : vector<1x8x128xf32> to vector<8x128xf32>
    %c0_43 = arith.constant 0 : index
    %c3_44 = arith.constant 3 : index
    %50 = memref.load %arg4[%c0_43, %c3_44] : memref<5x4xf32, #tpu.memory_space<smem>>
    %51 = vector.broadcast %50 : f32 to vector<8x128xf32>
    %52 = arith.mulf %51, %49 : vector<8x128xf32>
    %53 = arith.addf %29, %52 : vector<8x128xf32>
    %c0_45 = arith.constant 0 : index
    %c0_46 = arith.constant 0 : index
    %c124 = arith.constant 124 : index
    %54 = vector.load %arg6[%c0_45, %c0_46, %c124] : memref<4x8x256xf32, #tpu.memory_space<vmem>>, vector<1x8x128xf32>
    %55 = vector.shape_cast %54 : vector<1x8x128xf32> to vector<8x128xf32>
    %c1_47 = arith.constant 1 : index
    %c0_48 = arith.constant 0 : index
    %56 = memref.load %arg4[%c1_47, %c0_48] : memref<5x4xf32, #tpu.memory_space<smem>>
    %57 = vector.broadcast %56 : f32 to vector<8x128xf32>
    %58 = arith.mulf %57, %55 : vector<8x128xf32>
    %59 = arith.addf %35, %58 : vector<8x128xf32>
    %c1_49 = arith.constant 1 : index
    %c0_50 = arith.constant 0 : index
    %c124_51 = arith.constant 124 : index
    %60 = vector.load %arg6[%c1_49, %c0_50, %c124_51] : memref<4x8x256xf32, #tpu.memory_space<vmem>>, vector<1x8x128xf32>
    %61 = vector.shape_cast %60 : vector<1x8x128xf32> to vector<8x128xf32>
    %c1_52 = arith.constant 1 : index
    %c1_53 = arith.constant 1 : index
    %62 = memref.load %arg4[%c1_52, %c1_53] : memref<5x4xf32, #tpu.memory_space<smem>>
    %63 = vector.broadcast %62 : f32 to vector<8x128xf32>
    %64 = arith.mulf %63, %61 : vector<8x128xf32>
    %65 = arith.addf %41, %64 : vector<8x128xf32>
    %c2_54 = arith.constant 2 : index
    %c0_55 = arith.constant 0 : index
    %c124_56 = arith.constant 124 : index
    %66 = vector.load %arg6[%c2_54, %c0_55, %c124_56] : memref<4x8x256xf32, #tpu.memory_space<vmem>>, vector<1x8x128xf32>
    %67 = vector.shape_cast %66 : vector<1x8x128xf32> to vector<8x128xf32>
    %c1_57 = arith.constant 1 : index
    %c2_58 = arith.constant 2 : index
    %68 = memref.load %arg4[%c1_57, %c2_58] : memref<5x4xf32, #tpu.memory_space<smem>>
    %69 = vector.broadcast %68 : f32 to vector<8x128xf32>
    %70 = arith.mulf %69, %67 : vector<8x128xf32>
    %71 = arith.addf %47, %70 : vector<8x128xf32>
    %c3_59 = arith.constant 3 : index
    %c0_60 = arith.constant 0 : index
    %c124_61 = arith.constant 124 : index
    %72 = vector.load %arg6[%c3_59, %c0_60, %c124_61] : memref<4x8x256xf32, #tpu.memory_space<vmem>>, vector<1x8x128xf32>
    %73 = vector.shape_cast %72 : vector<1x8x128xf32> to vector<8x128xf32>
    %c1_62 = arith.constant 1 : index
    %c3_63 = arith.constant 3 : index
    %74 = memref.load %arg4[%c1_62, %c3_63] : memref<5x4xf32, #tpu.memory_space<smem>>
    %75 = vector.broadcast %74 : f32 to vector<8x128xf32>
    %76 = arith.mulf %75, %73 : vector<8x128xf32>
    %77 = arith.addf %53, %76 : vector<8x128xf32>
    %c0_64 = arith.constant 0 : index
    %c0_65 = arith.constant 0 : index
    %c120 = arith.constant 120 : index
    %78 = vector.load %arg6[%c0_64, %c0_65, %c120] : memref<4x8x256xf32, #tpu.memory_space<vmem>>, vector<1x8x128xf32>
    %79 = vector.shape_cast %78 : vector<1x8x128xf32> to vector<8x128xf32>
    %c2_66 = arith.constant 2 : index
    %c0_67 = arith.constant 0 : index
    %80 = memref.load %arg4[%c2_66, %c0_67] : memref<5x4xf32, #tpu.memory_space<smem>>
    %81 = vector.broadcast %80 : f32 to vector<8x128xf32>
    %82 = arith.mulf %81, %79 : vector<8x128xf32>
    %83 = arith.addf %59, %82 : vector<8x128xf32>
    %c1_68 = arith.constant 1 : index
    %c0_69 = arith.constant 0 : index
    %c120_70 = arith.constant 120 : index
    %84 = vector.load %arg6[%c1_68, %c0_69, %c120_70] : memref<4x8x256xf32, #tpu.memory_space<vmem>>, vector<1x8x128xf32>
    %85 = vector.shape_cast %84 : vector<1x8x128xf32> to vector<8x128xf32>
    %c2_71 = arith.constant 2 : index
    %c1_72 = arith.constant 1 : index
    %86 = memref.load %arg4[%c2_71, %c1_72] : memref<5x4xf32, #tpu.memory_space<smem>>
    %87 = vector.broadcast %86 : f32 to vector<8x128xf32>
    %88 = arith.mulf %87, %85 : vector<8x128xf32>
    %89 = arith.addf %65, %88 : vector<8x128xf32>
    %c2_73 = arith.constant 2 : index
    %c0_74 = arith.constant 0 : index
    %c120_75 = arith.constant 120 : index
    %90 = vector.load %arg6[%c2_73, %c0_74, %c120_75] : memref<4x8x256xf32, #tpu.memory_space<vmem>>, vector<1x8x128xf32>
    %91 = vector.shape_cast %90 : vector<1x8x128xf32> to vector<8x128xf32>
    %c2_76 = arith.constant 2 : index
    %c2_77 = arith.constant 2 : index
    %92 = memref.load %arg4[%c2_76, %c2_77] : memref<5x4xf32, #tpu.memory_space<smem>>
    %93 = vector.broadcast %92 : f32 to vector<8x128xf32>
    %94 = arith.mulf %93, %91 : vector<8x128xf32>
    %95 = arith.addf %71, %94 : vector<8x128xf32>
    %c3_78 = arith.constant 3 : index
    %c0_79 = arith.constant 0 : index
    %c120_80 = arith.constant 120 : index
    %96 = vector.load %arg6[%c3_78, %c0_79, %c120_80] : memref<4x8x256xf32, #tpu.memory_space<vmem>>, vector<1x8x128xf32>
    %97 = vector.shape_cast %96 : vector<1x8x128xf32> to vector<8x128xf32>
    %c2_81 = arith.constant 2 : index
    %c3_82 = arith.constant 3 : index
    %98 = memref.load %arg4[%c2_81, %c3_82] : memref<5x4xf32, #tpu.memory_space<smem>>
    %99 = vector.broadcast %98 : f32 to vector<8x128xf32>
    %100 = arith.mulf %99, %97 : vector<8x128xf32>
    %101 = arith.addf %77, %100 : vector<8x128xf32>
    %c0_83 = arith.constant 0 : index
    %c0_84 = arith.constant 0 : index
    %c112 = arith.constant 112 : index
    %102 = vector.load %arg6[%c0_83, %c0_84, %c112] : memref<4x8x256xf32, #tpu.memory_space<vmem>>, vector<1x8x128xf32>
    %103 = vector.shape_cast %102 : vector<1x8x128xf32> to vector<8x128xf32>
    %c3_85 = arith.constant 3 : index
    %c0_86 = arith.constant 0 : index
    %104 = memref.load %arg4[%c3_85, %c0_86] : memref<5x4xf32, #tpu.memory_space<smem>>
    %105 = vector.broadcast %104 : f32 to vector<8x128xf32>
    %106 = arith.mulf %105, %103 : vector<8x128xf32>
    %107 = arith.addf %83, %106 : vector<8x128xf32>
    %c1_87 = arith.constant 1 : index
    %c0_88 = arith.constant 0 : index
    %c112_89 = arith.constant 112 : index
    %108 = vector.load %arg6[%c1_87, %c0_88, %c112_89] : memref<4x8x256xf32, #tpu.memory_space<vmem>>, vector<1x8x128xf32>
    %109 = vector.shape_cast %108 : vector<1x8x128xf32> to vector<8x128xf32>
    %c3_90 = arith.constant 3 : index
    %c1_91 = arith.constant 1 : index
    %110 = memref.load %arg4[%c3_90, %c1_91] : memref<5x4xf32, #tpu.memory_space<smem>>
    %111 = vector.broadcast %110 : f32 to vector<8x128xf32>
    %112 = arith.mulf %111, %109 : vector<8x128xf32>
    %113 = arith.addf %89, %112 : vector<8x128xf32>
    %c2_92 = arith.constant 2 : index
    %c0_93 = arith.constant 0 : index
    %c112_94 = arith.constant 112 : index
    %114 = vector.load %arg6[%c2_92, %c0_93, %c112_94] : memref<4x8x256xf32, #tpu.memory_space<vmem>>, vector<1x8x128xf32>
    %115 = vector.shape_cast %114 : vector<1x8x128xf32> to vector<8x128xf32>
    %c3_95 = arith.constant 3 : index
    %c2_96 = arith.constant 2 : index
    %116 = memref.load %arg4[%c3_95, %c2_96] : memref<5x4xf32, #tpu.memory_space<smem>>
    %117 = vector.broadcast %116 : f32 to vector<8x128xf32>
    %118 = arith.mulf %117, %115 : vector<8x128xf32>
    %119 = arith.addf %95, %118 : vector<8x128xf32>
    %c3_97 = arith.constant 3 : index
    %c0_98 = arith.constant 0 : index
    %c112_99 = arith.constant 112 : index
    %120 = vector.load %arg6[%c3_97, %c0_98, %c112_99] : memref<4x8x256xf32, #tpu.memory_space<vmem>>, vector<1x8x128xf32>
    %121 = vector.shape_cast %120 : vector<1x8x128xf32> to vector<8x128xf32>
    %c3_100 = arith.constant 3 : index
    %c3_101 = arith.constant 3 : index
    %122 = memref.load %arg4[%c3_100, %c3_101] : memref<5x4xf32, #tpu.memory_space<smem>>
    %123 = vector.broadcast %122 : f32 to vector<8x128xf32>
    %124 = arith.mulf %123, %121 : vector<8x128xf32>
    %125 = arith.addf %101, %124 : vector<8x128xf32>
    %c0_102 = arith.constant 0 : index
    %c0_103 = arith.constant 0 : index
    %c96 = arith.constant 96 : index
    %126 = vector.load %arg6[%c0_102, %c0_103, %c96] : memref<4x8x256xf32, #tpu.memory_space<vmem>>, vector<1x8x128xf32>
    %127 = vector.shape_cast %126 : vector<1x8x128xf32> to vector<8x128xf32>
    %c4 = arith.constant 4 : index
    %c0_104 = arith.constant 0 : index
    %128 = memref.load %arg4[%c4, %c0_104] : memref<5x4xf32, #tpu.memory_space<smem>>
    %129 = vector.broadcast %128 : f32 to vector<8x128xf32>
    %130 = arith.mulf %129, %127 : vector<8x128xf32>
    %131 = arith.addf %107, %130 : vector<8x128xf32>
    %c1_105 = arith.constant 1 : index
    %c0_106 = arith.constant 0 : index
    %c96_107 = arith.constant 96 : index
    %132 = vector.load %arg6[%c1_105, %c0_106, %c96_107] : memref<4x8x256xf32, #tpu.memory_space<vmem>>, vector<1x8x128xf32>
    %133 = vector.shape_cast %132 : vector<1x8x128xf32> to vector<8x128xf32>
    %c4_108 = arith.constant 4 : index
    %c1_109 = arith.constant 1 : index
    %134 = memref.load %arg4[%c4_108, %c1_109] : memref<5x4xf32, #tpu.memory_space<smem>>
    %135 = vector.broadcast %134 : f32 to vector<8x128xf32>
    %136 = arith.mulf %135, %133 : vector<8x128xf32>
    %137 = arith.addf %113, %136 : vector<8x128xf32>
    %c2_110 = arith.constant 2 : index
    %c0_111 = arith.constant 0 : index
    %c96_112 = arith.constant 96 : index
    %138 = vector.load %arg6[%c2_110, %c0_111, %c96_112] : memref<4x8x256xf32, #tpu.memory_space<vmem>>, vector<1x8x128xf32>
    %139 = vector.shape_cast %138 : vector<1x8x128xf32> to vector<8x128xf32>
    %c4_113 = arith.constant 4 : index
    %c2_114 = arith.constant 2 : index
    %140 = memref.load %arg4[%c4_113, %c2_114] : memref<5x4xf32, #tpu.memory_space<smem>>
    %141 = vector.broadcast %140 : f32 to vector<8x128xf32>
    %142 = arith.mulf %141, %139 : vector<8x128xf32>
    %143 = arith.addf %119, %142 : vector<8x128xf32>
    %c3_115 = arith.constant 3 : index
    %c0_116 = arith.constant 0 : index
    %c96_117 = arith.constant 96 : index
    %144 = vector.load %arg6[%c3_115, %c0_116, %c96_117] : memref<4x8x256xf32, #tpu.memory_space<vmem>>, vector<1x8x128xf32>
    %145 = vector.shape_cast %144 : vector<1x8x128xf32> to vector<8x128xf32>
    %c4_118 = arith.constant 4 : index
    %c3_119 = arith.constant 3 : index
    %146 = memref.load %arg4[%c4_118, %c3_119] : memref<5x4xf32, #tpu.memory_space<smem>>
    %147 = vector.broadcast %146 : f32 to vector<8x128xf32>
    %148 = arith.mulf %147, %145 : vector<8x128xf32>
    %149 = arith.addf %125, %148 : vector<8x128xf32>
    %150 = arith.addf %131, %137 : vector<8x128xf32>
    %151 = arith.addf %143, %149 : vector<8x128xf32>
    %152 = arith.addf %150, %151 : vector<8x128xf32>
    %c0_120 = arith.constant 0 : index
    %c0_121 = arith.constant 0 : index
    %153 = vector.load %arg5[%c0_120, %c0_121] : memref<8x128xf32, #tpu.memory_space<vmem>>, vector<8x128xf32>
    tpu.vector_store %arg5[%c0_120, %c0_121], %152 {strides = array<i32>} : memref<8x128xf32, #tpu.memory_space<vmem>>, vector<8x128xf32>,
    return
  }
  func.func @transform_0(%arg0: i32, %arg1: i32) -> (i32, i32, i32) {
    %c0_i32 = arith.constant 0 : i32
    %c0_i32_0 = arith.constant 0 : i32
    return %arg0, %c0_i32, %arg1 : i32, i32, i32
  }
  func.func @transform_1(%arg0: i32, %arg1: i32) -> (i32, i32, i32) {
    %c1_i32 = arith.constant 1 : i32
    %0 = arith.muli %arg1, %c1_i32 : i32
    %c1_i32_0 = arith.constant 1 : i32
    %1 = arith.subi %0, %c1_i32_0 : i32
    %c0_i32 = arith.constant 0 : i32
    %2 = arith.maxsi %1, %c0_i32 : i32
    %c0_i32_1 = arith.constant 0 : i32
    %c0_i32_2 = arith.constant 0 : i32
    return %arg0, %c0_i32_1, %2 : i32, i32, i32
  }
  func.func @transform_2(%arg0: i32, %arg1: i32) -> (i32, i32) {
    %c0_i32 = arith.constant 0 : i32
    %c0_i32_0 = arith.constant 0 : i32
    %c0_i32_1 = arith.constant 0 : i32
    return %c0_i32, %c0_i32_0 : i32, i32
  }
  func.func @transform_3(%arg0: i32, %arg1: i32) -> (i32, i32) {
    %c0_i32 = arith.constant 0 : i32
    return %arg0, %arg1 : i32, i32
  }
}

</mosaic_0001>

<llo_original>
// kernel: tpu_custom_call.1
$region0: #{tpu_custom_call.1}
  #allocation0 [shape = 'u32[]', space=smem, size = 0x4, offset = 0x4, fixed_abs, tag = 'smem constant byte address 0x4 - core index']
  #allocation1 [shape = 'u32[144,128]{1,0:T(1,128)}', space=vmem, size = 0x12000, scoped, tag = 'internal scratch']
  #allocation2 [shape = 'f32[4,8,256]{2,1,0:T(8,128)}', space=vmem, size = 0x8000, scoped, tag = 'scratch operand']
  %s0 = inlined_call_operand.hbm [shape: f32[8,4,128], index: 0, kind: input, shape index: {}]
  %s1 = inlined_call_operand.hbm [shape: f32[8,4,128], index: 1, kind: input, shape index: {}]
  %s2 = inlined_call_operand.vmem [shape: f32[5,4], index: 2, kind: input, shape index: {}]
  %s3 = inlined_call_operand.hbm [shape: f32[8,128], index: 3, kind: output, shape index: {}]
  %s4 = sld [smem:[#allocation0]]
  $region42: #{tpu_custom_call.1} parent=0
    _
  %s6 = ssub.s32 1, %s4
  %s7 = scalar_select 0, %s6, %s4
  $region1: #{tpu_custom_call.1} parent=0
    #allocation3 [shape = 'u8[16384]{0}', space=vmem, size = 0x4000, scoped, tag = 'input window, operand 0, single buffered']
    #allocation4 [shape = 's32[1]{0}', space=sflag, size = 0x4, scoped, tag = 'scoped memory for tpu_custom_call.1']
    #allocation5 [shape = 's32[1]{0}', space=sflag, size = 0x4, scoped, tag = 'scoped memory for tpu_custom_call.1']
    #allocation6 [shape = 's32[1]{0}', space=sflag, size = 0x4, scoped, tag = 'scoped memory for tpu_custom_call.1']
    #allocation7 [shape = 'u8[16384]{0}', space=vmem, size = 0x4000, scoped, tag = 'input window, operand 1, single buffered']
    #allocation8 [shape = 's32[1]{0}', space=sflag, size = 0x4, scoped, tag = 'scoped memory for tpu_custom_call.1']
    #allocation9 [shape = 'u8[4096]{0}', space=smem, size = 0x1000, scoped, tag = 'input window, operand 2, single buffered']
    #allocation10 [shape = 'u8[4096]{0}', space=vmem, size = 0x1000, scoped, tag = 'output window, operand 0, single buffered']
    %8 = vsyncpa [#allocation4], 0
    %9 = vsyncpa [#allocation8], 0
    %10 = vsyncpa [#allocation6], 0
    %11 = vsyncpa [#allocation5], 0
    // Predicated region
    $region2: #{tpu_custom_call.1} parent=1 // pred_check
      _
    $region3: #{tpu_custom_call.1} parent=1 // pred_check_branch
      %13 = sbr.rel (0) target = $region5
    $region4: #{tpu_custom_call.1} parent=1 // pred_region
      %s15 = ssub.s32 512, 512
      %16 = vsyncadd [#allocation4], %s15
      %s17 = sshll.u32 [#allocation3], 4
      %s18 = int_to_ptr.vmem [resolvable:$true] %s17
      %23 = dma.hbm_to_vmem [thread:$0]  %s0, 512, %s18, [#allocation4], 64, 64, 4
    $region5: #{tpu_custom_call.1} parent=1 // pred_fallthru
      _
    // Predicated region
    $region6: #{tpu_custom_call.1} parent=1 // pred_check
      _
    $region7: #{tpu_custom_call.1} parent=1 // pred_check_branch
      %25 = sbr.rel (0) target = $region9
    $region8: #{tpu_custom_call.1} parent=1 // pred_region
      %s26 = ssub.s32 0, 1
      %p27 = scmp.gt.s32.totalorder %s26, 0
      %s28 = scalar_select %p27, %s26, 0
      %s30 = ssub.s32 512, 512
      %31 = vsyncadd [#allocation8], %s30
      %s32 = smul.addr %s28, 64
      %s33 = scalar_lea.hbm %s1, %s32
      %s34 = sshll.u32 [#allocation7], 4
      %s35 = int_to_ptr.vmem [resolvable:$true] %s34
      %40 = dma.hbm_to_vmem [thread:$0]  %s33, 512, %s35, [#allocation8], 64, 64, 4
    $region9: #{tpu_custom_call.1} parent=1 // pred_fallthru
      _
    // Predicated region
    $region10: #{tpu_custom_call.1} parent=1 // pred_check
      _
    $region11: #{tpu_custom_call.1} parent=1 // pred_check_branch
      %42 = sbr.rel (0) target = $region13
    $region12: #{tpu_custom_call.1} parent=1 // pred_region
      %s44 = ssub.s32 128, 128
      %45 = vsyncadd [#allocation6], %s44
      %s47 = sshll.u32 %s2, 4
      %s48 = int_to_ptr.vmem [resolvable:$true] %s47
      %50 = dma.vmem_to_smem %s48, 128, [#allocation9], [#allocation6]
    $region13: #{tpu_custom_call.1} parent=1 // pred_fallthru
      _
    // Predicated region
    $region14: #{tpu_custom_call.1} parent=1 // pred_check
      _
    $region15: #{tpu_custom_call.1} parent=1 // pred_check_branch
      %52 = sbr.rel (0) target = $region17
    $region16: #{tpu_custom_call.1} parent=1 // pred_region
      %53 = dma.done [#allocation4], 512
    $region17: #{tpu_custom_call.1} parent=1 // pred_fallthru
      _
    // Predicated region
    $region18: #{tpu_custom_call.1} parent=1 // pred_check
      _
    $region19: #{tpu_custom_call.1} parent=1 // pred_check_branch
      %55 = sbr.rel (0) target = $region21
    $region20: #{tpu_custom_call.1} parent=1 // pred_region
      %56 = dma.done [#allocation8], 512
    $region21: #{tpu_custom_call.1} parent=1 // pred_fallthru
      _
    // Predicated region
    $region22: #{tpu_custom_call.1} parent=1 // pred_check
      _
    $region23: #{tpu_custom_call.1} parent=1 // pred_check_branch
      %58 = sbr.rel (0) target = $region25
    $region24: #{tpu_custom_call.1} parent=1 // pred_region
      %59 = dma.done [#allocation6], 128
    $region25: #{tpu_custom_call.1} parent=1 // pred_fallthru
      _
    %60 = sfence
    %s61 = ssub.s32 0, 1
    %p62 = scmp.gt.s32.totalorder %s61, 0
    %s63 = scalar_select %p62, %s61, 0
    %v64 = vld [vmem:[#allocation3] sm:$0x1]
    %v65 = vld [vmem:[#allocation3 + $0x4] sm:$0x1]
    %v66 = vld [vmem:[#allocation3 + $0x8] sm:$0x1]
    %v67 = vld [vmem:[#allocation3 + $0xc] sm:$0x1]
    %v68 = vld [vmem:[#allocation3 + $0x10] sm:$0x1]
    %v69 = vld [vmem:[#allocation3 + $0x14] sm:$0x1]
    %v70 = vld [vmem:[#allocation3 + $0x18] sm:$0x1]
    %v71 = vld [vmem:[#allocation3 + $0x1c] sm:$0x1]
    %v80 = vrot.slane %v65, 7
    %vm81 = vcmask 1041409
    %v82 = vsel %vm81, %v80, %v64
    %v83 = vrot.slane %v66, 6
    %vm84 = vcmask 1042434
    %v85 = vsel %vm84, %v83, %v82
    %v86 = vrot.slane %v67, 5
    %vm87 = vcmask 1043459
    %v88 = vsel %vm87, %v86, %v85
    %v89 = vrot.slane %v68, 4
    %vm90 = vcmask 1044484
    %v91 = vsel %vm90, %v89, %v88
    %v92 = vrot.slane %v69, 3
    %vm93 = vcmask 1045509
    %v94 = vsel %vm93, %v92, %v91
    %v95 = vrot.slane %v70, 2
    %vm96 = vcmask 1046534
    %v97 = vsel %vm96, %v95, %v94
    %v98 = vrot.slane %v71, 1
    %vm99 = vcmask 1047559
    %v100 = vsel %vm99, %v98, %v97
    %102 = vst [vmem:[#allocation2 + $0x8] sm:$0xff] %v100
    %v103 = vld [vmem:[#allocation3 + $0x1] sm:$0x1]
    %v104 = vld [vmem:[#allocation3 + $0x5] sm:$0x1]
    %v105 = vld [vmem:[#allocation3 + $0x9] sm:$0x1]
    %v106 = vld [vmem:[#allocation3 + $0xd] sm:$0x1]
    %v107 = vld [vmem:[#allocation3 + $0x11] sm:$0x1]
    %v108 = vld [vmem:[#allocation3 + $0x15] sm:$0x1]
    %v109 = vld [vmem:[#allocation3 + $0x19] sm:$0x1]
    %v110 = vld [vmem:[#allocation3 + $0x1d] sm:$0x1]
    %v119 = vrot.slane %v104, 7
    %v120 = vsel %vm81, %v119, %v103
    %v121 = vrot.slane %v105, 6
    %v122 = vsel %vm84, %v121, %v120
    %v123 = vrot.slane %v106, 5
    %v124 = vsel %vm87, %v123, %v122
    %v125 = vrot.slane %v107, 4
    %v126 = vsel %vm90, %v125, %v124
    %v127 = vrot.slane %v108, 3
    %v128 = vsel %vm93, %v127, %v126
    %v129 = vrot.slane %v109, 2
    %v130 = vsel %vm96, %v129, %v128
    %v131 = vrot.slane %v110, 1
    %v132 = vsel %vm99, %v131, %v130
    %s134 = scalar_lea.vmem [#allocation2], 16
    %135 = vst [vmem:[%s134 + $0x8] sm:$0xff] %v132
    %v136 = vld [vmem:[#allocation3 + $0x2] sm:$0x1]
    %v137 = vld [vmem:[#allocation3 + $0x6] sm:$0x1]
    %v138 = vld [vmem:[#allocation3 + $0xa] sm:$0x1]
    %v139 = vld [vmem:[#allocation3 + $0xe] sm:$0x1]
    %v140 = vld [vmem:[#allocation3 + $0x12] sm:$0x1]
    %v141 = vld [vmem:[#allocation3 + $0x16] sm:$0x1]
    %v142 = vld [vmem:[#allocation3 + $0x1a] sm:$0x1]
    %v143 = vld [vmem:[#allocation3 + $0x1e] sm:$0x1]
    %v152 = vrot.slane %v137, 7
    %v153 = vsel %vm81, %v152, %v136
    %v154 = vrot.slane %v138, 6
    %v155 = vsel %vm84, %v154, %v153
    %v156 = vrot.slane %v139, 5
    %v157 = vsel %vm87, %v156, %v155
    %v158 = vrot.slane %v140, 4
    %v159 = vsel %vm90, %v158, %v157
    %v160 = vrot.slane %v141, 3
    %v161 = vsel %vm93, %v160, %v159
    %v162 = vrot.slane %v142, 2
    %v163 = vsel %vm96, %v162, %v161
    %v164 = vrot.slane %v143, 1
    %v165 = vsel %vm99, %v164, %v163
    %s167 = scalar_lea.vmem [#allocation2], 32
    %168 = vst [vmem:[%s167 + $0x8] sm:$0xff] %v165
    %v169 = vld [vmem:[#allocation3 + $0x3] sm:$0x1]
    %v170 = vld [vmem:[#allocation3 + $0x7] sm:$0x1]
    %v171 = vld [vmem:[#allocation3 + $0xb] sm:$0x1]
    %v172 = vld [vmem:[#allocation3 + $0xf] sm:$0x1]
    %v173 = vld [vmem:[#allocation3 + $0x13] sm:$0x1]
    %v174 = vld [vmem:[#allocation3 + $0x17] sm:$0x1]
    %v175 = vld [vmem:[#allocation3 + $0x1b] sm:$0x1]
    %v176 = vld [vmem:[#allocation3 + $0x1f] sm:$0x1]
    %v185 = vrot.slane %v170, 7
    %v186 = vsel %vm81, %v185, %v169
    %v187 = vrot.slane %v171, 6
    %v188 = vsel %vm84, %v187, %v186
    %v189 = vrot.slane %v172, 5
    %v190 = vsel %vm87, %v189, %v188
    %v191 = vrot.slane %v173, 4
    %v192 = vsel %vm90, %v191, %v190
    %v193 = vrot.slane %v174, 3
    %v194 = vsel %vm93, %v193, %v192
    %v195 = vrot.slane %v175, 2
    %v196 = vsel %vm96, %v195, %v194
    %v197 = vrot.slane %v176, 1
    %v198 = vsel %vm99, %v197, %v196
    %s200 = scalar_lea.vmem [#allocation2], 48
    %201 = vst [vmem:[%s200 + $0x8] sm:$0xff] %v198
    %p202 = scmp.eq.s32.totalorder 0, 0
    // Predicated region
    $region26: #{tpu_custom_call.1} parent=1 // pred_check
      %p203 = pneg %p202
    $region27: #{tpu_custom_call.1} parent=1 // pred_check_branch
      %205 = sbr.rel (%p203) target = $region29
    $region28: #{tpu_custom_call.1} parent=1 // pred_region
      %206 = vst [vmem:[#allocation2] sm:$0xff] 0.0
      %207 = vst [vmem:[#allocation2 + $0x10] sm:$0xff] 0.0
      %208 = vst [vmem:[#allocation2 + $0x20] sm:$0xff] 0.0
      %209 = vst [vmem:[#allocation2 + $0x30] sm:$0xff] 0.0
    $region29: #{tpu_custom_call.1} parent=1 // pred_fallthru
      _
    %p210 = scmp.gt.s32.totalorder 0, 0
    // Predicated region
    $region30: #{tpu_custom_call.1} parent=1 // pred_check
      %p211 = pneg %p210
    $region31: #{tpu_custom_call.1} parent=1 // pred_check_branch
      %213 = sbr.rel (%p211) target = $region33
    $region32: #{tpu_custom_call.1} parent=1 // pred_region
      %v214 = vld [vmem:[#allocation7] sm:$0x1]
      %v215 = vld [vmem:[#allocation7 + $0x4] sm:$0x1]
      %v216 = vld [vmem:[#allocation7 + $0x8] sm:$0x1]
      %v217 = vld [vmem:[#allocation7 + $0xc] sm:$0x1]
      %v218 = vld [vmem:[#allocation7 + $0x10] sm:$0x1]
      %v219 = vld [vmem:[#allocation7 + $0x14] sm:$0x1]
      %v220 = vld [vmem:[#allocation7 + $0x18] sm:$0x1]
      %v221 = vld [vmem:[#allocation7 + $0x1c] sm:$0x1]
      %v230 = vrot.slane %v215, 7
      %v231 = vsel %vm81, %v230, %v214
      %v232 = vrot.slane %v216, 6
      %v233 = vsel %vm84, %v232, %v231
      %v234 = vrot.slane %v217, 5
      %v235 = vsel %vm87, %v234, %v233
      %v236 = vrot.slane %v218, 4
      %v237 = vsel %vm90, %v236, %v235
      %v238 = vrot.slane %v219, 3
      %v239 = vsel %vm93, %v238, %v237
      %v240 = vrot.slane %v220, 2
      %v241 = vsel %vm96, %v240, %v239
      %v242 = vrot.slane %v221, 1
      %v243 = vsel %vm99, %v242, %v241
      %245 = vst [vmem:[#allocation2] sm:$0xff] %v243
      %v246 = vld [vmem:[#allocation7 + $0x1] sm:$0x1]
      %v247 = vld [vmem:[#allocation7 + $0x5] sm:$0x1]
      %v248 = vld [vmem:[#allocation7 + $0x9] sm:$0x1]
      %v249 = vld [vmem:[#allocation7 + $0xd] sm:$0x1]
      %v250 = vld [vmem:[#allocation7 + $0x11] sm:$0x1]
      %v251 = vld [vmem:[#allocation7 + $0x15] sm:$0x1]
      %v252 = vld [vmem:[#allocation7 + $0x19] sm:$0x1]
      %v253 = vld [vmem:[#allocation7 + $0x1d] sm:$0x1]
      %v262 = vrot.slane %v247, 7
      %v263 = vsel %vm81, %v262, %v246
      %v264 = vrot.slane %v248, 6
      %v265 = vsel %vm84, %v264, %v263
      %v266 = vrot.slane %v249, 5
      %v267 = vsel %vm87, %v266, %v265
      %v268 = vrot.slane %v250, 4
      %v269 = vsel %vm90, %v268, %v267
      %v270 = vrot.slane %v251, 3
      %v271 = vsel %vm93, %v270, %v269
      %v272 = vrot.slane %v252, 2
      %v273 = vsel %vm96, %v272, %v271
      %v274 = vrot.slane %v253, 1
      %v275 = vsel %vm99, %v274, %v273
      %277 = vst [vmem:[%s134] sm:$0xff] %v275
      %v278 = vld [vmem:[#allocation7 + $0x2] sm:$0x1]
      %v279 = vld [vmem:[#allocation7 + $0x6] sm:$0x1]
      %v280 = vld [vmem:[#allocation7 + $0xa] sm:$0x1]
      %v281 = vld [vmem:[#allocation7 + $0xe] sm:$0x1]
      %v282 = vld [vmem:[#allocation7 + $0x12] sm:$0x1]
      %v283 = vld [vmem:[#allocation7 + $0x16] sm:$0x1]
      %v284 = vld [vmem:[#allocation7 + $0x1a] sm:$0x1]
      %v285 = vld [vmem:[#allocation7 + $0x1e] sm:$0x1]
      %v294 = vrot.slane %v279, 7
      %v295 = vsel %vm81, %v294, %v278
      %v296 = vrot.slane %v280, 6
      %v297 = vsel %vm84, %v296, %v295
      %v298 = vrot.slane %v281, 5
      %v299 = vsel %vm87, %v298, %v297
      %v300 = vrot.slane %v282, 4
      %v301 = vsel %vm90, %v300, %v299
      %v302 = vrot.slane %v283, 3
      %v303 = vsel %vm93, %v302, %v301
      %v304 = vrot.slane %v284, 2
      %v305 = vsel %vm96, %v304, %v303
      %v306 = vrot.slane %v285, 1
      %v307 = vsel %vm99, %v306, %v305
      %309 = vst [vmem:[%s167] sm:$0xff] %v307
      %v310 = vld [vmem:[#allocation7 + $0x3] sm:$0x1]
      %v311 = vld [vmem:[#allocation7 + $0x7] sm:$0x1]
      %v312 = vld [vmem:[#allocation7 + $0xb] sm:$0x1]
      %v313 = vld [vmem:[#allocation7 + $0xf] sm:$0x1]
      %v314 = vld [vmem:[#allocation7 + $0x13] sm:$0x1]
      %v315 = vld [vmem:[#allocation7 + $0x17] sm:$0x1]
      %v316 = vld [vmem:[#allocation7 + $0x1b] sm:$0x1]
      %v317 = vld [vmem:[#allocation7 + $0x1f] sm:$0x1]
      %v326 = vrot.slane %v311, 7
      %v327 = vsel %vm81, %v326, %v310
      %v328 = vrot.slane %v312, 6
      %v329 = vsel %vm84, %v328, %v327
      %v330 = vrot.slane %v313, 5
      %v331 = vsel %vm87, %v330, %v329
      %v332 = vrot.slane %v314, 4
      %v333 = vsel %vm90, %v332, %v331
      %v334 = vrot.slane %v315, 3
      %v335 = vsel %vm93, %v334, %v333
      %v336 = vrot.slane %v316, 2
      %v337 = vsel %vm96, %v336, %v335
      %v338 = vrot.slane %v317, 1
      %v339 = vsel %vm99, %v338, %v337
      %341 = vst [vmem:[%s200] sm:$0xff] %v339
    $region33: #{tpu_custom_call.1} parent=1 // pred_fallthru
      _
    %v342 = vld [vmem:[#allocation2 + $0x8] sm:$0xff]
    %s343 = sld [smem:[#allocation9]]
    %v344 = vstv %s343
    %v345 = vmul.f32 %v344, %v342
    %v346 = vadd.f32 %v345, 0.0
    %v347 = vld [vmem:[%s134 + $0x8] sm:$0xff]
    %s348 = sld [smem:[#allocation9 + $0x1]]
    %v349 = vstv %s348
    %v350 = vmul.f32 %v349, %v347
    %v351 = vadd.f32 %v350, 0.0
    %v352 = vld [vmem:[%s167 + $0x8] sm:$0xff]
    %s353 = sld [smem:[#allocation9 + $0x2]]
    %v354 = vstv %s353
    %v355 = vmul.f32 %v354, %v352
    %v356 = vadd.f32 %v355, 0.0
    %v357 = vld [vmem:[%s200 + $0x8] sm:$0xff]
    %s358 = sld [smem:[#allocation9 + $0x3]]
    %v359 = vstv %s358
    %v360 = vmul.f32 %v359, %v357
    %v361 = vadd.f32 %v360, 0.0
    %v362 = vld [vmem:[#allocation2] sm:$0xff]
    %s363 = sld [smem:[#allocation9 + $0x80]]
    %v364 = vstv %s363
    %v365 = vmul.f32 %v364, %v362
    %v366 = vmul.f32 %v364, %v342
    %369 = vrot.lane.b32.xlu0 %v365, 4
    %v370 = vpop.permute.xlu0 %369
    %371 = vrot.lane.b32.xlu0 %v366, 4
    %v372 = vpop.permute.xlu0 %371
    %vm373 = vcmask 31744
    %v374 = vsel %vm373, %v370, %v372
    %v376 = vadd.f32 %v346, %v374
    %v377 = vld [vmem:[%s134] sm:$0xff]
    %s378 = sld [smem:[#allocation9 + $0x81]]
    %v379 = vstv %s378
    %v380 = vmul.f32 %v379, %v377
    %v381 = vmul.f32 %v379, %v347
    %384 = vrot.lane.b32.xlu0 %v380, 4
    %v385 = vpop.permute.xlu0 %384
    %386 = vrot.lane.b32.xlu0 %v381, 4
    %v387 = vpop.permute.xlu0 %386
    %v388 = vsel %vm373, %v385, %v387
    %v390 = vadd.f32 %v351, %v388
    %v391 = vld [vmem:[%s167] sm:$0xff]
    %s392 = sld [smem:[#allocation9 + $0x82]]
    %v393 = vstv %s392
    %v394 = vmul.f32 %v393, %v391
    %v395 = vmul.f32 %v393, %v352
    %398 = vrot.lane.b32.xlu0 %v394, 4
    %v399 = vpop.permute.xlu0 %398
    %400 = vrot.lane.b32.xlu0 %v395, 4
    %v401 = vpop.permute.xlu0 %400
    %v402 = vsel %vm373, %v399, %v401
    %v404 = vadd.f32 %v356, %v402
    %v405 = vld [vmem:[%s200] sm:$0xff]
    %s406 = sld [smem:[#allocation9 + $0x83]]
    %v407 = vstv %s406
    %v408 = vmul.f32 %v407, %v405
    %v409 = vmul.f32 %v407, %v357
    %412 = vrot.lane.b32.xlu0 %v408, 4
    %v413 = vpop.permute.xlu0 %412
    %414 = vrot.lane.b32.xlu0 %v409, 4
    %v415 = vpop.permute.xlu0 %414
    %v416 = vsel %vm373, %v413, %v415
    %v418 = vadd.f32 %v361, %v416
    %s419 = sld [smem:[#allocation9 + $0x100]]
    %v420 = vstv %s419
    %v421 = vmul.f32 %v420, %v362
    %v422 = vmul.f32 %v420, %v342
    %425 = vrot.lane.b32.xlu0 %v421, 8
    %v426 = vpop.permute.xlu0 %425
    %427 = vrot.lane.b32.xlu0 %v422, 8
    %v428 = vpop.permute.xlu0 %427
    %vm429 = vcmask 64512
    %v430 = vsel %vm429, %v426, %v428
    %v432 = vadd.f32 %v376, %v430
    %s433 = sld [smem:[#allocation9 + $0x101]]
    %v434 = vstv %s433
    %v435 = vmul.f32 %v434, %v377
    %v436 = vmul.f32 %v434, %v347
    %439 = vrot.lane.b32.xlu0 %v435, 8
    %v440 = vpop.permute.xlu0 %439
    %441 = vrot.lane.b32.xlu0 %v436, 8
    %v442 = vpop.permute.xlu0 %441
    %v443 = vsel %vm429, %v440, %v442
    %v445 = vadd.f32 %v390, %v443
    %s446 = sld [smem:[#allocation9 + $0x102]]
    %v447 = vstv %s446
    %v448 = vmul.f32 %v447, %v391
    %v449 = vmul.f32 %v447, %v352
    %452 = vrot.lane.b32.xlu0 %v448, 8
    %v453 = vpop.permute.xlu0 %452
    %454 = vrot.lane.b32.xlu0 %v449, 8
    %v455 = vpop.permute.xlu0 %454
    %v456 = vsel %vm429, %v453, %v455
    %v458 = vadd.f32 %v404, %v456
    %s459 = sld [smem:[#allocation9 + $0x103]]
    %v460 = vstv %s459
    %v461 = vmul.f32 %v460, %v405
    %v462 = vmul.f32 %v460, %v357
    %465 = vrot.lane.b32.xlu0 %v461, 8
    %v466 = vpop.permute.xlu0 %465
    %467 = vrot.lane.b32.xlu0 %v462, 8
    %v468 = vpop.permute.xlu0 %467
    %v469 = vsel %vm429, %v466, %v468
    %v471 = vadd.f32 %v418, %v469
    %s472 = sld [smem:[#allocation9 + $0x180]]
    %v473 = vstv %s472
    %v474 = vmul.f32 %v473, %v362
    %v475 = vmul.f32 %v473, %v342
    %478 = vrot.lane.b32.xlu0 %v474, 16
    %v479 = vpop.permute.xlu0 %478
    %480 = vrot.lane.b32.xlu0 %v475, 16
    %v481 = vpop.permute.xlu0 %480
    %vm482 = vcmask 130048
    %v483 = vsel %vm482, %v479, %v481
    %v485 = vadd.f32 %v432, %v483
    %s486 = sld [smem:[#allocation9 + $0x181]]
    %v487 = vstv %s486
    %v488 = vmul.f32 %v487, %v377
    %v489 = vmul.f32 %v487, %v347
    %492 = vrot.lane.b32.xlu0 %v488, 16
    %v493 = vpop.permute.xlu0 %492
    %494 = vrot.lane.b32.xlu0 %v489, 16
    %v495 = vpop.permute.xlu0 %494
    %v496 = vsel %vm482, %v493, %v495
    %v498 = vadd.f32 %v445, %v496
    %s499 = sld [smem:[#allocation9 + $0x182]]
    %v500 = vstv %s499
    %v501 = vmul.f32 %v500, %v391
    %v502 = vmul.f32 %v500, %v352
    %505 = vrot.lane.b32.xlu0 %v501, 16
    %v506 = vpop.permute.xlu0 %505
    %507 = vrot.lane.b32.xlu0 %v502, 16
    %v508 = vpop.permute.xlu0 %507
    %v509 = vsel %vm482, %v506, %v508
    %v511 = vadd.f32 %v458, %v509
    %s512 = sld [smem:[#allocation9 + $0x183]]
    %v513 = vstv %s512
    %v514 = vmul.f32 %v513, %v405
    %v515 = vmul.f32 %v513, %v357
    %518 = vrot.lane.b32.xlu0 %v514, 16
    %v519 = vpop.permute.xlu0 %518
    %520 = vrot.lane.b32.xlu0 %v515, 16
    %v521 = vpop.permute.xlu0 %520
    %v522 = vsel %vm482, %v519, %v521
    %v524 = vadd.f32 %v471, %v522
    %s525 = sld [smem:[#allocation9 + $0x200]]
    %v526 = vstv %s525
    %v527 = vmul.f32 %v526, %v362
    %v528 = vmul.f32 %v526, %v342
    %531 = vrot.lane.b32.xlu0 %v527, 32
    %v532 = vpop.permute.xlu0 %531
    %533 = vrot.lane.b32.xlu0 %v528, 32
    %v534 = vpop.permute.xlu0 %533
    %vm535 = vcmask 261120
    %v536 = vsel %vm535, %v532, %v534
    %v538 = vadd.f32 %v485, %v536
    %s539 = sld [smem:[#allocation9 + $0x201]]
    %v540 = vstv %s539
    %v541 = vmul.f32 %v540, %v377
    %v542 = vmul.f32 %v540, %v347
    %545 = vrot.lane.b32.xlu0 %v541, 32
    %v546 = vpop.permute.xlu0 %545
    %547 = vrot.lane.b32.xlu0 %v542, 32
    %v548 = vpop.permute.xlu0 %547
    %v549 = vsel %vm535, %v546, %v548
    %v551 = vadd.f32 %v498, %v549
    %s552 = sld [smem:[#allocation9 + $0x202]]
    %v553 = vstv %s552
    %v554 = vmul.f32 %v553, %v391
    %v555 = vmul.f32 %v553, %v352
    %558 = vrot.lane.b32.xlu0 %v554, 32
    %v559 = vpop.permute.xlu0 %558
    %560 = vrot.lane.b32.xlu0 %v555, 32
    %v561 = vpop.permute.xlu0 %560
    %v562 = vsel %vm535, %v559, %v561
    %v564 = vadd.f32 %v511, %v562
    %s565 = sld [smem:[#allocation9 + $0x203]]
    %v566 = vstv %s565
    %v567 = vmul.f32 %v566, %v405
    %v568 = vmul.f32 %v566, %v357
    %571 = vrot.lane.b32.xlu0 %v567, 32
    %v572 = vpop.permute.xlu0 %571
    %573 = vrot.lane.b32.xlu0 %v568, 32
    %v574 = vpop.permute.xlu0 %573
    %v575 = vsel %vm535, %v572, %v574
    %v577 = vadd.f32 %v524, %v575
    %v578 = vadd.f32 %v538, %v551
    %v579 = vadd.f32 %v564, %v577
    %v580 = vadd.f32 %v578, %v579
    %581 = vst [vmem:[#allocation10] sm:$0xff] %v580
    // Predicated region
    $region34: #{tpu_custom_call.1} parent=1 // pred_check
      _
    $region35: #{tpu_custom_call.1} parent=1 // pred_check_branch
      %583 = sbr.rel (0) target = $region37
    $region36: #{tpu_custom_call.1} parent=1 // pred_region
      %s585 = ssub.s32 128, 128
      %586 = vsyncadd [#allocation5], %s585
      %s588 = sshll.u32 [#allocation10], 4
      %s589 = int_to_ptr.vmem [resolvable:$true] %s588
      %591 = dma.vmem_to_hbm [thread:$0]  %s589, 128, %s3, [#allocation5]
    $region37: #{tpu_custom_call.1} parent=1 // pred_fallthru
      _
    // Predicated region
    $region38: #{tpu_custom_call.1} parent=1 // pred_check
      _
    $region39: #{tpu_custom_call.1} parent=1 // pred_check_branch
      %593 = sbr.rel (0) target = $region41
    $region40: #{tpu_custom_call.1} parent=1 // pred_region
      %594 = dma.done [#allocation5], 128
    $region41: #{tpu_custom_call.1} parent=1 // pred_fallthru
      _
    %595 = vsyncpa [#allocation4], 1
    %596 = vsyncpa [#allocation8], 1
    %597 = vsyncpa [#allocation5], 1
    %598 = vsyncpa [#allocation6], 1

</llo_original>
